<compile_context>
chip_gen: v6e
topology: v6e:2x2x1
jax: 0.10.0
libtpu: 0.0.40
codegen_flags: <defaults>
</compile_context>

<pallas_src>
import functools
import math

import jax
import jax.numpy as jnp
from jax.experimental import pallas as pl
from jax.experimental.pallas import tpu as pltpu


_LANES = 128
_MIN_GRID_STEPS = 4   # >= 2 steps per TensorCore on v7x: keeps the "parallel"
                      # batch axis split across both TCs and pipelining live.


def _cdiv(a, b):
    return -(-a // b)


def _round_up(x, m):
    return _cdiv(x, m) * m


def _vmem_budgets():
    """Generation-aware (per-block byte budget, vmem_limit_bytes)."""
    try:
        vmem_phys = pltpu.get_tpu_info().vmem_capacity_bytes
    except Exception:
        vmem_phys = 64 * 1024 * 1024          # conservative (v7x per-TC) default
    if vmem_phys <= 64 * 1024 * 1024:
        # v7x: 64 MiB physical per TC -> cap 4-buffer footprint at ~40 MiB.
        total_buffers = 40 * 1024 * 1024
        vmem_limit = 48 * 1024 * 1024
    else:
        # v5e / v6e: 128 MiB physical -> push tiles much larger.
        total_buffers = 64 * 1024 * 1024
        vmem_limit = 96 * 1024 * 1024
    # 2 double-buffers for x + 2 for y dominate the footprint.
    return total_buffers // 4, vmem_limit


def _fold_layout(x, log_scale_vector):
    """Fold batch into the lane axis: (B, D) -> (B/reps, lcm(D, 128)) lanes.

    Makes every output row lane-dense (unmasked vst) whenever B permits.
    """
    B, D = x.shape
    if D % _LANES == 0:
        return x, log_scale_vector, False      # already lane-dense
    L = (D * _LANES) // math.gcd(D, _LANES)    # lcm(D, 128)
    reps = L // D
    if B % reps != 0:
        return x, log_scale_vector, False      # awkward batch: keep (B, D) blocks
    x2 = x.reshape(B // reps, L)
    s2 = jnp.tile(log_scale_vector, (1, reps))
    return x2, s2, True


def _pick_tile_rows(R, C, itemsize, per_block_budget):
    """Largest row tile that fits the per-block VMEM budget, keeps sublane
    packing full, and leaves >= _MIN_GRID_STEPS grid steps for large data."""
    pack = max(8, 32 // itemsize)              # f32: 8 rows, bf16: 16 rows
    max_rows_vmem = max(pack, (per_block_budget // (C * itemsize)) // pack * pack)
    rows_per_step = _round_up(_cdiv(R, _MIN_GRID_STEPS), pack)
    tb = min(max_rows_vmem, rows_per_step, _round_up(R, pack))
    tb = max(pack, tb)
    if tb >= R:
        return R                               # single full-array block (small input)
    return tb


def _scale_mul_kernel(s_ref, x_ref, y_ref, *, sign, keep_f32):
    # s_ref: (1, C) log-scale row, x_ref/y_ref: (TB, C) data tile.
    # exp of the (1, C) row goes to the EUP slot (free while mem-bound).
    scale = jnp.exp(sign * s_ref[...].astype(jnp.float32))        # (1, C) f32
    if keep_f32:
        y = scale * x_ref[...].astype(jnp.float32)
    else:
        # bf16 inputs: multiply in bf16 (v6e/v7x bf16 VALU), no widen round-trip.
        y = scale.astype(x_ref.dtype) * x_ref[...]
    y_ref[...] = y.astype(y_ref.dtype)


def scaling_layer(log_scale_vector, x, logdet, invert=False):
    """Pallas implementation of ScalingLayer.forward.

    Args:
      log_scale_vector: (1, D) float32 parameter.
      x:                (B, D) data.
      logdet:           per-sample running log-determinant (any broadcastable shape).
      invert:           Python bool.

    Returns:
      (y, logdet_new) with the same shapes/dtypes as (x, logdet).
    """
    B, D = x.shape
    sign = -1.0 if invert else 1.0

    # ---- logdet path: trivial scalar work, hoisted out of the kernel ----
    ldj = jnp.sum(log_scale_vector.astype(jnp.float32))
    logdet_new = (logdet.astype(jnp.float32) + sign * ldj).astype(logdet.dtype)

    # ---- lane-dense layout: fold batch into the 128-lane axis when possible ----
    x2, s2, folded = _fold_layout(x, log_scale_vector)
    R, C = x2.shape
    itemsize = jnp.dtype(x2.dtype).itemsize

    per_block_budget, vmem_limit = _vmem_budgets()
    tb = _pick_tile_rows(R, C, itemsize, per_block_budget)
    grid_steps = _cdiv(R, tb)                  # partial last block allowed

    cost = pl.CostEstimate(
        flops=2 * R * C,
        transcendentals=C * grid_steps,
        bytes_accessed=2 * R * C * itemsize + C * 4,
    )

    kernel = functools.partial(_scale_mul_kernel, sign=sign, keep_f32=(itemsize >= 4))
    # NOTE: if a profile ever shows exposed DMA on the x stream at these tile
    # sizes, add pipeline_mode=pl.Buffered(3) to the x BlockSpec.
    y2 = pl.pallas_call(
        kernel,
        out_shape=jax.ShapeDtypeStruct((R, C), x2.dtype),
        grid=(grid_steps,),
        in_specs=[
            pl.BlockSpec((1, C), lambda i: (0, 0)),       # log-scale (resident)
            pl.BlockSpec((tb, C), lambda i: (i, 0)),      # x row tile
        ],
        out_specs=pl.BlockSpec((tb, C), lambda i: (i, 0)),
        compiler_params=pltpu.CompilerParams(
            dimension_semantics=("parallel",),            # 2 TCs on v7x; neutral v5e/v6e
            vmem_limit_bytes=vmem_limit,
        ),
        cost_estimate=cost,
    )(s2, x2)

    y = y2.reshape(B, D) if folded else y2
    return y, logdet_new


def _reference(log_scale_vector, x, logdet, invert):
    ldj = jnp.sum(log_scale_vector)
    if invert:
        return jnp.exp(-log_scale_vector) * x, logdet - ldj
    return jnp.exp(log_scale_vector) * x, logdet + ldj


if __name__ == "__main__":
    key = jax.random.PRNGKey(0)

    ok = True
    cases = [
        dict(B=4,  D=32,  dtype=jnp.float32),   # small D -> folded to 128 lanes
        dict(B=16, D=784, dtype=jnp.float32),   # NICE/MNIST dim -> lcm fold (8 samples/row)
        dict(B=32, D=256, dtype=jnp.float32),   # already lane-dense, multi-step grid
        dict(B=6,  D=40,  dtype=jnp.float32),   # awkward batch: no fold, full-array block
        dict(B=16, D=256, dtype=jnp.bfloat16),  # bf16 path (mul in bf16)
    ]
    for c in cases:
        key, k_s, k_x, k_ld = jax.random.split(key, 4)
        B, D, dt = c["B"], c["D"], c["dtype"]
        log_scale_vector = jax.random.normal(k_s, (1, D), dtype=jnp.float32)
        x = jax.random.normal(k_x, (B, D), dtype=jnp.float32).astype(dt)
        logdet = jax.random.normal(k_ld, (B, 1), dtype=jnp.float32)

        for invert in (False, True):
            y, ld = scaling_layer(log_scale_vector, x, logdet, invert=invert)
            jax.block_until_ready((y, ld))
            y_ref, ld_ref = _reference(log_scale_vector, x.astype(jnp.float32),
                                       logdet, invert)
            tol = 1e-5 if dt == jnp.float32 else 2e-2
            ok &= bool(jnp.allclose(y.astype(jnp.float32), y_ref, atol=tol, rtol=tol))
            ok &= bool(jnp.allclose(ld, ld_ref, atol=1e-5, rtol=1e-5))

    if ok:
        print("KERNEL_OK")
    else:
        print("KERNEL_MISMATCH")
</pallas_src>

<mosaic_0001>
module attributes {stable_mosaic.version = 11 : i64} {
  func.func @_scale_mul_kernel(%arg0: i32, %arg1: memref<1x128xf32, #tpu.memory_space<vmem>>, %arg2: memref<1x128xf32, #tpu.memory_space<vmem>>, %arg3: memref<1x128xf32, #tpu.memory_space<vmem>>) attributes {dimension_semantics = [#tpu.dimension_semantics<parallel>], iteration_bounds = array<i64: 1>, scalar_prefetch = 0 : i64, scratch_operands = 0 : i64, tpu.core_type = #tpu.core_type<tc>, window_params = [{pipeline_mode = #tpu.pipeline_mode<synchronous>, transform_indices = @transform_0, window_bounds = array<i64: 1, 128>}, {transform_indices = @transform_1, window_bounds = array<i64: 1, 128>}, {transform_indices = @transform_2, window_bounds = array<i64: 1, 128>}]} {
    %c0 = arith.constant 0 : index
    %c0_0 = arith.constant 0 : index
    %0 = vector.load %arg1[%c0, %c0_0] : memref<1x128xf32, #tpu.memory_space<vmem>>, vector<1x128xf32>
    %cst = arith.constant 1.000000e+00 : f32
    %1 = vector.broadcast %cst : f32 to vector<1x128xf32>
    %2 = arith.mulf %1, %0 : vector<1x128xf32>
    %3 = math.exp %2 : vector<1x128xf32>
    %c0_1 = arith.constant 0 : index
    %c0_2 = arith.constant 0 : index
    %4 = vector.load %arg2[%c0_1, %c0_2] : memref<1x128xf32, #tpu.memory_space<vmem>>, vector<1x128xf32>
    %5 = arith.mulf %3, %4 : vector<1x128xf32>
    %c0_3 = arith.constant 0 : index
    %c0_4 = arith.constant 0 : index
    %6 = vector.load %arg3[%c0_3, %c0_4] : memref<1x128xf32, #tpu.memory_space<vmem>>, vector<1x128xf32>
    tpu.vector_store %arg3[%c0_3, %c0_4], %5 {strides = array<i32>} : memref<1x128xf32, #tpu.memory_space<vmem>>, vector<1x128xf32>,
    return
  }
  func.func @transform_0(%arg0: i32) -> (i32, i32) {
    %c0_i32 = arith.constant 0 : i32
    %c0_i32_0 = arith.constant 0 : i32
    %c0_i32_1 = arith.constant 0 : i32
    return %c0_i32, %c0_i32_0 : i32, i32
  }
  func.func @transform_1(%arg0: i32) -> (i32, i32) {
    %c0_i32 = arith.constant 0 : i32
    %c0_i32_0 = arith.constant 0 : i32
    return %arg0, %c0_i32 : i32, i32
  }
  func.func @transform_2(%arg0: i32) -> (i32, i32) {
    %c0_i32 = arith.constant 0 : i32
    %c0_i32_0 = arith.constant 0 : i32
    return %arg0, %c0_i32 : i32, i32
  }
}

</mosaic_0001>

<llo_original>
// kernel: tpu_custom_call.1
$region0: #{tpu_custom_call.1}
  #allocation0 [shape = 'u32[]', space=smem, size = 0x4, offset = 0x4, fixed_abs, tag = 'smem constant byte address 0x4 - core index']
  #allocation1 [shape = 'u32[144,128]{1,0:T(1,128)}', space=vmem, size = 0x12000, scoped, tag = 'internal scratch']
  %s0 = inlined_call_operand.hbm [shape: f32[1,128], index: 0, kind: input, shape index: {}]
  %s1 = inlined_call_operand.vmem [shape: f32[1,128], index: 1, kind: input, shape index: {}]
  %s2 = inlined_call_operand.hbm [shape: f32[1,128], index: 2, kind: output, shape index: {}]
  %s3 = sld [smem:[#allocation0]]
  $region22: #{tpu_custom_call.1} parent=0
    _
  %s5 = ssub.s32 1, %s3
  %s6 = scalar_select 0, %s5, %s3
  $region1: #{tpu_custom_call.1} parent=0
    #allocation2 [shape = 'u8[512]{0}', space=vmem, size = 0x400, scoped, tag = 'input window, operand 0, single buffered']
    #allocation3 [shape = 's32[1]{0}', space=sflag, size = 0x4, scoped, tag = 'scoped memory for tpu_custom_call.1']
    #allocation4 [shape = 's32[1]{0}', space=sflag, size = 0x4, scoped, tag = 'scoped memory for tpu_custom_call.1']
    #allocation5 [shape = 'u8[512]{0}', space=vmem, size = 0x400, scoped, tag = 'output window, operand 0, single buffered']
    %7 = vsyncpa [#allocation3], 0
    %8 = vsyncpa [#allocation4], 0
    // Predicated region
    $region2: #{tpu_custom_call.1} parent=1 // pred_check
      _
    $region3: #{tpu_custom_call.1} parent=1 // pred_check_branch
      %10 = sbr.rel (0) target = $region5
    $region4: #{tpu_custom_call.1} parent=1 // pred_region
      %s12 = ssub.s32 16, 16
      %13 = vsyncadd [#allocation3], %s12
      %s15 = sshll.u32 [#allocation2], 4
      %s16 = int_to_ptr.vmem [resolvable:$true] %s15
      %18 = dma.hbm_to_vmem [thread:$0]  %s0, 16, %s16, [#allocation3]
    $region5: #{tpu_custom_call.1} parent=1 // pred_fallthru
      _
    // Predicated region
    $region6: #{tpu_custom_call.1} parent=1 // pred_check
      _
    $region7: #{tpu_custom_call.1} parent=1 // pred_check_branch
      %20 = sbr.rel (0) target = $region9
    $region8: #{tpu_custom_call.1} parent=1 // pred_region
      _
    $region9: #{tpu_custom_call.1} parent=1 // pred_fallthru
      _
    // Predicated region
    $region10: #{tpu_custom_call.1} parent=1 // pred_check
      _
    $region11: #{tpu_custom_call.1} parent=1 // pred_check_branch
      %22 = sbr.rel (0) target = $region13
    $region12: #{tpu_custom_call.1} parent=1 // pred_region
      %23 = dma.done [#allocation3], 16
    $region13: #{tpu_custom_call.1} parent=1 // pred_fallthru
      _
    %v24 = vld [vmem:[#allocation2] sm:$0x1]
    %v25 = vmul.f32 %v24, 1.442695
    %v26 = vpow.pop %v25
    %v27 = vld [vmem:[%s1] sm:$0x1]
    %v28 = vmul.f32 %v26, %v27
    %29 = vst [vmem:[#allocation5] sm:$0x1] %v28
    // Predicated region
    $region14: #{tpu_custom_call.1} parent=1 // pred_check
      _
    $region15: #{tpu_custom_call.1} parent=1 // pred_check_branch
      %31 = sbr.rel (0) target = $region17
    $region16: #{tpu_custom_call.1} parent=1 // pred_region
      %s33 = ssub.s32 16, 16
      %34 = vsyncadd [#allocation4], %s33
      %s36 = sshll.u32 [#allocation5], 4
      %s37 = int_to_ptr.vmem [resolvable:$true] %s36
      %39 = dma.vmem_to_hbm [thread:$0]  %s37, 16, %s2, [#allocation4]
    $region17: #{tpu_custom_call.1} parent=1 // pred_fallthru
      _
    // Predicated region
    $region18: #{tpu_custom_call.1} parent=1 // pred_check
      _
    $region19: #{tpu_custom_call.1} parent=1 // pred_check_branch
      %41 = sbr.rel (0) target = $region21
    $region20: #{tpu_custom_call.1} parent=1 // pred_region
      %42 = dma.done [#allocation4], 16
    $region21: #{tpu_custom_call.1} parent=1 // pred_fallthru
      _
    %43 = vsyncpa [#allocation3], 1
    %44 = vsyncpa [#allocation4], 1

</llo_original>
